<compile_context>
chip_gen: v6e
topology: v6e:2x2x1
jax: 0.10.0
libtpu: 0.0.40
codegen_flags: <defaults>
</compile_context>

<pallas_src>
import functools

import jax
import jax.numpy as jnp
from jax.experimental import pallas as pl
from jax.experimental.pallas import tpu as pltpu

BN_EPS = 1e-5


def _apply_activation(y, activation):
    if activation == "relu":
        return jnp.maximum(y, 0.0)
    elif activation == "tanh":
        return jnp.tanh(y)
    elif activation == "softsign":
        return y / (1.0 + jnp.abs(y))
    return y


def _round_up(v, m):
    return ((v + m - 1) // m) * m


# ------------------------------ fused kernel ------------------------------- #
def fused_convnet_kernel(*refs, n_layers, activation, compute_dtype):
    x_ref = refs[0]
    conv_refs = refs[1:1 + 2 * n_layers]
    w1_ref, b1_ref, w2_ref, b2_ref = refs[1 + 2 * n_layers:-1]
    out_ref = refs[-1]

    a = x_ref[...]                                   # (tb, L_in) lane-dense

    # Each conv+BN+activation layer is ONE banded matmul on the MXU:
    #   (tb, L_in*C_in) @ (L_in*C_in, L_out*C_out) + bias, then activation.
    for i in range(n_layers):
        w = conv_refs[2 * i][...]                    # (L_in*C_in, L_out*C_out)
        b = conv_refs[2 * i + 1][...]                # (1, L_out*C_out)
        a = jnp.dot(a.astype(compute_dtype), w,
                    preferred_element_type=jnp.float32) + b
        a = _apply_activation(a, activation)

    # fc1: single fused dot on the already lane-dense, l*C+c-ordered activation.
    h = jnp.dot(a.astype(compute_dtype), w1_ref[...],
                preferred_element_type=jnp.float32) + b1_ref[...]
    h = jnp.maximum(h, 0.0)                          # (tb, 128)

    # fc2: weights zero-padded to 128 output lanes -> lane-dense final store.
    out_ref[...] = jnp.dot(h.astype(compute_dtype), w2_ref[...],
                           preferred_element_type=jnp.float32) + b2_ref[...]


# ------------------------------- glue (JAX) -------------------------------- #
def calculate_output_length(input_length, kernel_sizes, padding=1):
    out_len = input_length
    for k in kernel_sizes:
        out_len = (out_len + 2 * padding - k) // 1 + 1
    return out_len


def _banded_conv_matrix(w_f, b_f, l_in, padding):
    """Build the dense banded matrix for one conv layer (trace time, tiny).

    w_f: (C_out, C_in, K) BN-folded weights; b_f: (C_out,) BN-folded bias.
    Returns Wb: (L_in*C_in, L_out*C_out), bb: (1, L_out*C_out), L_out.
    Row index = l_in*C_in + ci, column index = l_out*C_out + co.  Padding
    positions correspond to rows outside [0, L_in) and simply contribute 0.
    """
    c_out, c_in, K = w_f.shape
    l_out = l_in + 2 * padding - K + 1
    Wb = jnp.zeros((l_in * c_in, l_out * c_out), jnp.float32)
    for lo in range(l_out):
        for k in range(K):
            li = lo - padding + k
            if 0 <= li < l_in:
                blk = jnp.transpose(w_f[:, :, k])    # (c_in, c_out)
                Wb = Wb.at[li * c_in:(li + 1) * c_in,
                           lo * c_out:(lo + 1) * c_out].set(blk)
    bb = jnp.tile(b_f, (l_out,)).reshape(1, l_out * c_out)
    return Wb, bb, l_out


def convnet_forward(x, params, kernel_sizes, activation, padding=1,
                    row_block=None, use_bf16=False):
    """Fused ConvNet forward. x: (B, L) or (B, 1, L) float32 -> (B, 1)."""
    if x.ndim == 3:
        x = x[:, 0, :]
    x = x.astype(jnp.float32)
    B, L_in = x.shape
    n_layers = len(params["convs"])
    compute_dtype = jnp.bfloat16 if use_bf16 else jnp.float32

    # ---- trace-time parameter prep (tiny arrays, done once in XLA) -------- #
    conv_ws, conv_bs = [], []
    l_cur = L_in
    for p in params["convs"]:
        scale = p["gamma"] * jax.lax.rsqrt(p["var"] + BN_EPS)        # (C_out,)
        w_f = p["w"] * scale[:, None, None]                          # (C_out,C_in,K)
        b_f = (p["b"] - p["mean"]) * scale + p["beta"]               # (C_out,)
        Wb, bb, l_cur = _banded_conv_matrix(w_f, b_f, l_cur, padding)
        conv_ws.append(Wb.astype(compute_dtype))
        conv_bs.append(bb)

    c_last = params["convs"][-1]["w"].shape[0]
    l_final = calculate_output_length(L_in, kernel_sizes, padding)
    hidden = params["fc1_w"].shape[0]                                # 128
    # torch flatten index is c*L + l (channel-major); re-order fc1_w.T rows to
    # l*C + c to match the kernel's position-major activation layout.
    w1 = (params["fc1_w"].T
          .reshape(c_last, l_final, hidden)
          .transpose(1, 0, 2)
          .reshape(l_final * c_last, hidden)).astype(compute_dtype)
    b1 = params["fc1_b"].reshape(1, hidden)
    w2 = jnp.zeros((hidden, 128), jnp.float32).at[:, :1].set(
        params["fc2_w"].T).astype(compute_dtype)
    b2 = jnp.zeros((1, 128), jnp.float32).at[0, 0].set(params["fc2_b"][0])

    # ---- batch-row grid ----------------------------------------------------#
    # Small batches: one grid step (per-step overhead ~0.35us dominates here).
    # Large batches: >=2 parallel steps (v7x megacore) with tiles <=512 rows.
    if row_block is None:
        b8 = _round_up(B, 8)
        if b8 <= 256:
            row_block = b8
        else:
            row_block = min(_round_up(pl.cdiv(b8, 2), 8), 512)
    nb = pl.cdiv(B, row_block)
    B_pad = nb * row_block
    if B_pad != B:
        x = jnp.pad(x, ((0, B_pad - B), (0, 0)))

    def resident(arr):
        nd = arr.ndim
        return pl.BlockSpec(arr.shape, lambda i, _nd=nd: (0,) * _nd)

    weight_args = []
    for i in range(n_layers):
        weight_args += [conv_ws[i], conv_bs[i]]
    weight_args += [w1, b1, w2, b2]

    out = pl.pallas_call(
        functools.partial(fused_convnet_kernel,
                          n_layers=n_layers,
                          activation=activation,
                          compute_dtype=compute_dtype),
        out_shape=jax.ShapeDtypeStruct((B_pad, 128), jnp.float32),
        grid=(nb,),
        in_specs=[pl.BlockSpec((row_block, L_in), lambda i: (i, 0))]
                 + [resident(a) for a in weight_args],
        out_specs=pl.BlockSpec((row_block, 128), lambda i: (i, 0)),
        compiler_params=pltpu.CompilerParams(
            dimension_semantics=("parallel",)),
    )(x, *weight_args)
    return out[:B, :1]


# ----------------------- pure-JAX reference (check) ------------------------ #
def convnet_reference(x, params, kernel_sizes, activation, padding=1):
    if x.ndim == 2:
        x = x[:, None, :]
    for p in params["convs"]:
        y = jax.lax.conv_general_dilated(
            x, p["w"], window_strides=(1,), padding=[(padding, padding)],
            dimension_numbers=("NCH", "OIH", "NCH"))
        y = y + p["b"][None, :, None]
        inv = jax.lax.rsqrt(p["var"] + BN_EPS)[None, :, None]
        y = (y - p["mean"][None, :, None]) * inv * p["gamma"][None, :, None] \
            + p["beta"][None, :, None]
        x = _apply_activation(y, activation)
    flat = x.reshape(x.shape[0], -1)
    h = jnp.maximum(flat @ params["fc1_w"].T + params["fc1_b"], 0.0)
    return h @ params["fc2_w"].T + params["fc2_b"]


def init_params(key, n_layers, channels, kernel_sizes, input_length=5):
    params = {"convs": []}
    in_ch = 1
    for i in range(n_layers):
        out_ch, K = channels[i], kernel_sizes[i]
        key, k1, k2, k3, k4, k5, k6 = jax.random.split(key, 7)
        params["convs"].append(dict(
            w=0.3 * jax.random.normal(k1, (out_ch, in_ch, K), jnp.float32),
            b=0.1 * jax.random.normal(k2, (out_ch,), jnp.float32),
            gamma=1.0 + 0.1 * jax.random.normal(k3, (out_ch,), jnp.float32),
            beta=0.1 * jax.random.normal(k4, (out_ch,), jnp.float32),
            mean=0.1 * jax.random.normal(k5, (out_ch,), jnp.float32),
            var=0.5 + jax.random.uniform(k6, (out_ch,), jnp.float32),
        ))
        in_ch = out_ch
    fc1_in = calculate_output_length(input_length, kernel_sizes) * channels[-1]
    key, k1, k2, k3, k4 = jax.random.split(key, 5)
    params["fc1_w"] = 0.1 * jax.random.normal(k1, (128, fc1_in), jnp.float32)
    params["fc1_b"] = 0.1 * jax.random.normal(k2, (128,), jnp.float32)
    params["fc2_w"] = 0.1 * jax.random.normal(k3, (1, 128), jnp.float32)
    params["fc2_b"] = 0.1 * jax.random.normal(k4, (1,), jnp.float32)
    return params


if __name__ == "__main__":
    # Module config (the "5 input" variant): input length 5, 2 conv layers.
    n_layers = 2
    channels = [4, 8]
    kernel_sizes = [3, 3]
    activation = "relu"

    key = jax.random.PRNGKey(0)
    key, xkey = jax.random.split(key)
    batch = 8
    x = jax.random.normal(xkey, (batch, 5), jnp.float32)     # (N, 5) like PyTorch

    params = init_params(key, n_layers, channels, kernel_sizes, input_length=5)

    out = convnet_forward(x, params, kernel_sizes, activation)
    out = jax.block_until_ready(out)
    assert out.shape == (batch, 1), out.shape

    ref = convnet_reference(x, params, kernel_sizes, activation)
    assert jnp.allclose(out, ref, rtol=1e-4, atol=1e-4), \
        float(jnp.max(jnp.abs(out - ref)))
    print("KERNEL_OK")
</pallas_src>

<mosaic_0001>
module attributes {stable_mosaic.version = 11 : i64} {
  func.func @fused_convnet_kernel(%arg0: i32, %arg1: memref<8x5xf32, #tpu.memory_space<vmem>>, %arg2: memref<5x20xf32, #tpu.memory_space<vmem>>, %arg3: memref<1x20xf32, #tpu.memory_space<vmem>>, %arg4: memref<20x40xf32, #tpu.memory_space<vmem>>, %arg5: memref<1x40xf32, #tpu.memory_space<vmem>>, %arg6: memref<40x128xf32, #tpu.memory_space<vmem>>, %arg7: memref<1x128xf32, #tpu.memory_space<vmem>>, %arg8: memref<128x128xf32, #tpu.memory_space<vmem>>, %arg9: memref<1x128xf32, #tpu.memory_space<vmem>>, %arg10: memref<8x128xf32, #tpu.memory_space<vmem>>) attributes {dimension_semantics = [#tpu.dimension_semantics<parallel>], iteration_bounds = array<i64: 1>, scalar_prefetch = 0 : i64, scratch_operands = 0 : i64, tpu.core_type = #tpu.core_type<tc>, window_params = [{transform_indices = @transform_0, window_bounds = array<i64: 8, 5>}, {pipeline_mode = #tpu.pipeline_mode<synchronous>, transform_indices = @transform_1, window_bounds = array<i64: 5, 20>}, {pipeline_mode = #tpu.pipeline_mode<synchronous>, transform_indices = @transform_2, window_bounds = array<i64: 1, 20>}, {pipeline_mode = #tpu.pipeline_mode<synchronous>, transform_indices = @transform_3, window_bounds = array<i64: 20, 40>}, {pipeline_mode = #tpu.pipeline_mode<synchronous>, transform_indices = @transform_4, window_bounds = array<i64: 1, 40>}, {pipeline_mode = #tpu.pipeline_mode<synchronous>, transform_indices = @transform_5, window_bounds = array<i64: 40, 128>}, {pipeline_mode = #tpu.pipeline_mode<synchronous>, transform_indices = @transform_6, window_bounds = array<i64: 1, 128>}, {pipeline_mode = #tpu.pipeline_mode<synchronous>, transform_indices = @transform_7, window_bounds = array<i64: 128, 128>}, {pipeline_mode = #tpu.pipeline_mode<synchronous>, transform_indices = @transform_8, window_bounds = array<i64: 1, 128>}, {transform_indices = @transform_9, window_bounds = array<i64: 8, 128>}]} {
    %c0 = arith.constant 0 : index
    %c0_0 = arith.constant 0 : index
    %0 = vector.load %arg1[%c0, %c0_0] : memref<8x5xf32, #tpu.memory_space<vmem>>, vector<8x5xf32>
    %c0_1 = arith.constant 0 : index
    %c0_2 = arith.constant 0 : index
    %1 = vector.load %arg2[%c0_1, %c0_2] : memref<5x20xf32, #tpu.memory_space<vmem>>, vector<5x20xf32>
    %c0_3 = arith.constant 0 : index
    %c0_4 = arith.constant 0 : index
    %2 = vector.load %arg3[%c0_3, %c0_4] : memref<1x20xf32, #tpu.memory_space<vmem>>, vector<1x20xf32>
    %cst = arith.constant dense<0.000000e+00> : vector<8x20xf32>
    %3 = tpu.matmul %0, %1, %cst {dimension_numbers = #tpu.dot_dimension_numbers<[1], [0], [0], [1], [0, 0, 1, 1], [], []>} : vector<8x5xf32>, vector<5x20xf32>, vector<8x20xf32> -> vector<8x20xf32>
    %4 = vector.broadcast %2 : vector<1x20xf32> to vector<8x20xf32>
    %5 = arith.addf %3, %4 : vector<8x20xf32>
    %cst_5 = arith.constant 0.000000e+00 : f32
    %6 = vector.broadcast %cst_5 : f32 to vector<8x20xf32>
    %7 = arith.maximumf %5, %6 : vector<8x20xf32>
    %c0_6 = arith.constant 0 : index
    %c0_7 = arith.constant 0 : index
    %8 = vector.load %arg4[%c0_6, %c0_7] : memref<20x40xf32, #tpu.memory_space<vmem>>, vector<20x40xf32>
    %c0_8 = arith.constant 0 : index
    %c0_9 = arith.constant 0 : index
    %9 = vector.load %arg5[%c0_8, %c0_9] : memref<1x40xf32, #tpu.memory_space<vmem>>, vector<1x40xf32>
    %cst_10 = arith.constant dense<0.000000e+00> : vector<8x40xf32>
    %10 = tpu.matmul %7, %8, %cst_10 {dimension_numbers = #tpu.dot_dimension_numbers<[1], [0], [0], [1], [0, 0, 1, 1], [], []>} : vector<8x20xf32>, vector<20x40xf32>, vector<8x40xf32> -> vector<8x40xf32>
    %11 = vector.broadcast %9 : vector<1x40xf32> to vector<8x40xf32>
    %12 = arith.addf %10, %11 : vector<8x40xf32>
    %cst_11 = arith.constant 0.000000e+00 : f32
    %13 = vector.broadcast %cst_11 : f32 to vector<8x40xf32>
    %14 = arith.maximumf %12, %13 : vector<8x40xf32>
    %c0_12 = arith.constant 0 : index
    %c0_13 = arith.constant 0 : index
    %15 = vector.load %arg6[%c0_12, %c0_13] : memref<40x128xf32, #tpu.memory_space<vmem>>, vector<40x128xf32>
    %cst_14 = arith.constant dense<0.000000e+00> : vector<8x128xf32>
    %16 = tpu.matmul %14, %15, %cst_14 {dimension_numbers = #tpu.dot_dimension_numbers<[1], [0], [0], [1], [0, 0, 1, 1], [], []>} : vector<8x40xf32>, vector<40x128xf32>, vector<8x128xf32> -> vector<8x128xf32>
    %c0_15 = arith.constant 0 : index
    %c0_16 = arith.constant 0 : index
    %17 = vector.load %arg7[%c0_15, %c0_16] : memref<1x128xf32, #tpu.memory_space<vmem>>, vector<1x128xf32>
    %18 = vector.broadcast %17 : vector<1x128xf32> to vector<8x128xf32>
    %19 = arith.addf %16, %18 : vector<8x128xf32>
    %cst_17 = arith.constant 0.000000e+00 : f32
    %20 = vector.broadcast %cst_17 : f32 to vector<8x128xf32>
    %21 = arith.maximumf %19, %20 : vector<8x128xf32>
    %c0_18 = arith.constant 0 : index
    %c0_19 = arith.constant 0 : index
    %22 = vector.load %arg8[%c0_18, %c0_19] : memref<128x128xf32, #tpu.memory_space<vmem>>, vector<128x128xf32>
    %cst_20 = arith.constant dense<0.000000e+00> : vector<8x128xf32>
    %23 = tpu.matmul %21, %22, %cst_20 {dimension_numbers = #tpu.dot_dimension_numbers<[1], [0], [0], [1], [0, 0, 1, 1], [], []>} : vector<8x128xf32>, vector<128x128xf32>, vector<8x128xf32> -> vector<8x128xf32>
    %c0_21 = arith.constant 0 : index
    %c0_22 = arith.constant 0 : index
    %24 = vector.load %arg9[%c0_21, %c0_22] : memref<1x128xf32, #tpu.memory_space<vmem>>, vector<1x128xf32>
    %25 = vector.broadcast %24 : vector<1x128xf32> to vector<8x128xf32>
    %26 = arith.addf %23, %25 : vector<8x128xf32>
    %c0_23 = arith.constant 0 : index
    %c0_24 = arith.constant 0 : index
    %27 = vector.load %arg10[%c0_23, %c0_24] : memref<8x128xf32, #tpu.memory_space<vmem>>, vector<8x128xf32>
    tpu.vector_store %arg10[%c0_23, %c0_24], %26 {strides = array<i32>} : memref<8x128xf32, #tpu.memory_space<vmem>>, vector<8x128xf32>,
    return
  }
  func.func @transform_0(%arg0: i32) -> (i32, i32) {
    %c0_i32 = arith.constant 0 : i32
    %c0_i32_0 = arith.constant 0 : i32
    return %arg0, %c0_i32 : i32, i32
  }
  func.func @transform_1(%arg0: i32) -> (i32, i32) {
    %c0_i32 = arith.constant 0 : i32
    %c0_i32_0 = arith.constant 0 : i32
    %c0_i32_1 = arith.constant 0 : i32
    return %c0_i32, %c0_i32_0 : i32, i32
  }
  func.func @transform_2(%arg0: i32) -> (i32, i32) {
    %c0_i32 = arith.constant 0 : i32
    %c0_i32_0 = arith.constant 0 : i32
    %c0_i32_1 = arith.constant 0 : i32
    return %c0_i32, %c0_i32_0 : i32, i32
  }
  func.func @transform_3(%arg0: i32) -> (i32, i32) {
    %c0_i32 = arith.constant 0 : i32
    %c0_i32_0 = arith.constant 0 : i32
    %c0_i32_1 = arith.constant 0 : i32
    return %c0_i32, %c0_i32_0 : i32, i32
  }
  func.func @transform_4(%arg0: i32) -> (i32, i32) {
    %c0_i32 = arith.constant 0 : i32
    %c0_i32_0 = arith.constant 0 : i32
    %c0_i32_1 = arith.constant 0 : i32
    return %c0_i32, %c0_i32_0 : i32, i32
  }
  func.func @transform_5(%arg0: i32) -> (i32, i32) {
    %c0_i32 = arith.constant 0 : i32
    %c0_i32_0 = arith.constant 0 : i32
    %c0_i32_1 = arith.constant 0 : i32
    return %c0_i32, %c0_i32_0 : i32, i32
  }
  func.func @transform_6(%arg0: i32) -> (i32, i32) {
    %c0_i32 = arith.constant 0 : i32
    %c0_i32_0 = arith.constant 0 : i32
    %c0_i32_1 = arith.constant 0 : i32
    return %c0_i32, %c0_i32_0 : i32, i32
  }
  func.func @transform_7(%arg0: i32) -> (i32, i32) {
    %c0_i32 = arith.constant 0 : i32
    %c0_i32_0 = arith.constant 0 : i32
    %c0_i32_1 = arith.constant 0 : i32
    return %c0_i32, %c0_i32_0 : i32, i32
  }
  func.func @transform_8(%arg0: i32) -> (i32, i32) {
    %c0_i32 = arith.constant 0 : i32
    %c0_i32_0 = arith.constant 0 : i32
    %c0_i32_1 = arith.constant 0 : i32
    return %c0_i32, %c0_i32_0 : i32, i32
  }
  func.func @transform_9(%arg0: i32) -> (i32, i32) {
    %c0_i32 = arith.constant 0 : i32
    %c0_i32_0 = arith.constant 0 : i32
    return %arg0, %c0_i32 : i32, i32
  }
}

</mosaic_0001>

<llo_original>
// kernel: tpu_custom_call.1
$region0: #{tpu_custom_call.1}
  #allocation0 [shape = 'u32[]', space=smem, size = 0x4, offset = 0x4, fixed_abs, tag = 'smem constant byte address 0x4 - core index']
  #allocation1 [shape = 'u32[144,128]{1,0:T(1,128)}', space=vmem, size = 0x12000, scoped, tag = 'internal scratch']
  %s0 = inlined_call_operand.hbm [shape: f32[8,5], index: 0, kind: input, shape index: {}]
  %s1 = inlined_call_operand.hbm [shape: f32[5,20], index: 1, kind: input, shape index: {}]
  %s2 = inlined_call_operand.vmem [shape: f32[1,20], index: 2, kind: input, shape index: {}]
  %s3 = inlined_call_operand.hbm [shape: f32[20,40], index: 3, kind: input, shape index: {}]
  %s4 = inlined_call_operand.vmem [shape: f32[1,40], index: 4, kind: input, shape index: {}]
  %s5 = inlined_call_operand.hbm [shape: f32[40,128], index: 5, kind: input, shape index: {}]
  %s6 = inlined_call_operand.vmem [shape: f32[1,128], index: 6, kind: input, shape index: {}]
  %s7 = inlined_call_operand.hbm [shape: f32[128,128], index: 7, kind: input, shape index: {}]
  %s8 = inlined_call_operand.vmem [shape: f32[1,128], index: 8, kind: input, shape index: {}]
  %s9 = inlined_call_operand.hbm [shape: f32[8,128], index: 9, kind: output, shape index: {}]
  %s10 = sld [smem:[#allocation0]]
  $region66: #{tpu_custom_call.1} parent=0
    _
  %s12 = ssub.s32 1, %s10
  %s13 = scalar_select 0, %s12, %s10
  $region1: #{tpu_custom_call.1} parent=0
    #allocation2 [shape = 'u8[4096]{0}', space=vmem, size = 0x1000, scoped, tag = 'input window, operand 0, single buffered']
    #allocation3 [shape = 's32[1]{0}', space=sflag, size = 0x4, scoped, tag = 'scoped memory for tpu_custom_call.1']
    #allocation4 [shape = 's32[1]{0}', space=sflag, size = 0x4, scoped, tag = 'scoped memory for tpu_custom_call.1']
    #allocation5 [shape = 'u8[4096]{0}', space=vmem, size = 0x1000, scoped, tag = 'input window, operand 1, single buffered']
    #allocation6 [shape = 's32[1]{0}', space=sflag, size = 0x4, scoped, tag = 'scoped memory for tpu_custom_call.1']
    #allocation7 [shape = 'u8[12288]{0}', space=vmem, size = 0x3000, scoped, tag = 'input window, operand 3, single buffered']
    #allocation8 [shape = 'u8[20480]{0}', space=vmem, size = 0x5000, scoped, tag = 'input window, operand 5, single buffered']
    #allocation9 [shape = 's32[1]{0}', space=sflag, size = 0x4, scoped, tag = 'scoped memory for tpu_custom_call.1']
    #allocation10 [shape = 'u8[65536]{0}', space=vmem, size = 0x10000, scoped, tag = 'input window, operand 7, single buffered']
    #allocation11 [shape = 'u8[4096]{0}', space=vmem, size = 0x1000, scoped, tag = 'output window, operand 0, single buffered']
    %14 = vsyncpa [#allocation3], 0
    %15 = vsyncpa [#allocation6], 0
    %16 = vsyncpa [#allocation9], 0
    %17 = vsyncpa [#allocation4], 0
    // Predicated region
    $region2: #{tpu_custom_call.1} parent=1 // pred_check
      _
    $region3: #{tpu_custom_call.1} parent=1 // pred_check_branch
      %19 = sbr.rel (0) target = $region5
    $region4: #{tpu_custom_call.1} parent=1 // pred_region
      %s21 = ssub.s32 128, 128
      %22 = vsyncadd [#allocation3], %s21
      %s24 = sshll.u32 [#allocation2], 4
      %s25 = int_to_ptr.vmem [resolvable:$true] %s24
      %27 = dma.hbm_to_vmem [thread:$0]  %s0, 128, %s25, [#allocation3]
    $region5: #{tpu_custom_call.1} parent=1 // pred_fallthru
      _
    // Predicated region
    $region6: #{tpu_custom_call.1} parent=1 // pred_check
      _
    $region7: #{tpu_custom_call.1} parent=1 // pred_check_branch
      %29 = sbr.rel (0) target = $region9
    $region8: #{tpu_custom_call.1} parent=1 // pred_region
      %s31 = ssub.s32 128, 128
      %32 = vsyncadd [#allocation6], %s31
      %s34 = sshll.u32 [#allocation5], 4
      %s35 = int_to_ptr.vmem [resolvable:$true] %s34
      %37 = dma.hbm_to_vmem [thread:$0]  %s1, 128, %s35, [#allocation6]
    $region9: #{tpu_custom_call.1} parent=1 // pred_fallthru
      _
    // Predicated region
    $region10: #{tpu_custom_call.1} parent=1 // pred_check
      _
    $region11: #{tpu_custom_call.1} parent=1 // pred_check_branch
      %39 = sbr.rel (0) target = $region13
    $region12: #{tpu_custom_call.1} parent=1 // pred_region
      _
    $region13: #{tpu_custom_call.1} parent=1 // pred_fallthru
      _
    // Predicated region
    $region14: #{tpu_custom_call.1} parent=1 // pred_check
      _
    $region15: #{tpu_custom_call.1} parent=1 // pred_check_branch
      %41 = sbr.rel (0) target = $region17
    $region16: #{tpu_custom_call.1} parent=1 // pred_region
      %s43 = ssub.s32 384, 384
      %44 = vsyncadd [#allocation6], %s43
      %s45 = sshll.u32 [#allocation7], 4
      %s46 = int_to_ptr.vmem [resolvable:$true] %s45
      %51 = dma.hbm_to_vmem [thread:$0]  %s3, 384, %s46, [#allocation6], 128, 128, 8
    $region17: #{tpu_custom_call.1} parent=1 // pred_fallthru
      _
    // Predicated region
    $region18: #{tpu_custom_call.1} parent=1 // pred_check
      _
    $region19: #{tpu_custom_call.1} parent=1 // pred_check_branch
      %53 = sbr.rel (0) target = $region21
    $region20: #{tpu_custom_call.1} parent=1 // pred_region
      _
    $region21: #{tpu_custom_call.1} parent=1 // pred_fallthru
      _
    // Predicated region
    $region22: #{tpu_custom_call.1} parent=1 // pred_check
      _
    $region23: #{tpu_custom_call.1} parent=1 // pred_check_branch
      %55 = sbr.rel (0) target = $region25
    $region24: #{tpu_custom_call.1} parent=1 // pred_region
      %s57 = ssub.s32 640, 640
      %58 = vsyncadd [#allocation9], %s57
      %s59 = sshll.u32 [#allocation8], 4
      %s60 = int_to_ptr.vmem [resolvable:$true] %s59
      %65 = dma.hbm_to_vmem [thread:$0]  %s5, 640, %s60, [#allocation9], 128, 128, 8
    $region25: #{tpu_custom_call.1} parent=1 // pred_fallthru
      _
    // Predicated region
    $region26: #{tpu_custom_call.1} parent=1 // pred_check
      _
    $region27: #{tpu_custom_call.1} parent=1 // pred_check_branch
      %67 = sbr.rel (0) target = $region29
    $region28: #{tpu_custom_call.1} parent=1 // pred_region
      _
    $region29: #{tpu_custom_call.1} parent=1 // pred_fallthru
      _
    // Predicated region
    $region30: #{tpu_custom_call.1} parent=1 // pred_check
      _
    $region31: #{tpu_custom_call.1} parent=1 // pred_check_branch
      %69 = sbr.rel (0) target = $region33
    $region32: #{tpu_custom_call.1} parent=1 // pred_region
      %s71 = ssub.s32 2048, 2048
      %72 = vsyncadd [#allocation9], %s71
      %s73 = sshll.u32 [#allocation10], 4
      %s74 = int_to_ptr.vmem [resolvable:$true] %s73
      %79 = dma.hbm_to_vmem [thread:$0]  %s7, 2048, %s74, [#allocation9], 128, 128, 8
    $region33: #{tpu_custom_call.1} parent=1 // pred_fallthru
      _
    // Predicated region
    $region34: #{tpu_custom_call.1} parent=1 // pred_check
      _
    $region35: #{tpu_custom_call.1} parent=1 // pred_check_branch
      %81 = sbr.rel (0) target = $region37
    $region36: #{tpu_custom_call.1} parent=1 // pred_region
      _
    $region37: #{tpu_custom_call.1} parent=1 // pred_fallthru
      _
    // Predicated region
    $region38: #{tpu_custom_call.1} parent=1 // pred_check
      _
    $region39: #{tpu_custom_call.1} parent=1 // pred_check_branch
      %83 = sbr.rel (0) target = $region41
    $region40: #{tpu_custom_call.1} parent=1 // pred_region
      %84 = dma.done [#allocation3], 128
    $region41: #{tpu_custom_call.1} parent=1 // pred_fallthru
      _
    // Predicated region
    $region42: #{tpu_custom_call.1} parent=1 // pred_check
      _
    $region43: #{tpu_custom_call.1} parent=1 // pred_check_branch
      %86 = sbr.rel (0) target = $region45
    $region44: #{tpu_custom_call.1} parent=1 // pred_region
      %87 = dma.done [#allocation6], 128
    $region45: #{tpu_custom_call.1} parent=1 // pred_fallthru
      _
    // Predicated region
    $region46: #{tpu_custom_call.1} parent=1 // pred_check
      _
    $region47: #{tpu_custom_call.1} parent=1 // pred_check_branch
      %89 = sbr.rel (0) target = $region49
    $region48: #{tpu_custom_call.1} parent=1 // pred_region
      %90 = dma.done [#allocation6], 384
    $region49: #{tpu_custom_call.1} parent=1 // pred_fallthru
      _
    // Predicated region
    $region50: #{tpu_custom_call.1} parent=1 // pred_check
      _
    $region51: #{tpu_custom_call.1} parent=1 // pred_check_branch
      %92 = sbr.rel (0) target = $region53
    $region52: #{tpu_custom_call.1} parent=1 // pred_region
      %93 = dma.done [#allocation9], 640
    $region53: #{tpu_custom_call.1} parent=1 // pred_fallthru
      _
    // Predicated region
    $region54: #{tpu_custom_call.1} parent=1 // pred_check
      _
    $region55: #{tpu_custom_call.1} parent=1 // pred_check_branch
      %95 = sbr.rel (0) target = $region57
    $region56: #{tpu_custom_call.1} parent=1 // pred_region
      %96 = dma.done [#allocation9], 2048
    $region57: #{tpu_custom_call.1} parent=1 // pred_fallthru
      _
    %v97 = vld [vmem:[#allocation2] sm:$0xff]
    %v98 = vld [vmem:[#allocation5] sm:$0x1f]
    %v99 = vld [vmem:[%s2] sm:$0x1]
    %v101 = vlaneseq
    %v102 = vshrl.u32 %v101, 7
    %v103 = vsub.s32 0, %v102
    %v104 = vrot.slane %v99, %v103
    %vm106 = vcmask 39936
    %v108 = vsel %vm106, %v97, 0
    %vm110 = vcmask 1044480
    %v112 = vsel %vm110, %v98, 0
    %114 = vmatprep.subr.mxu0 0.0
    %115 = vmatpush1.msra.mxu0 0.0
    %116 = vmatprep.subr.mxu0 0.0
    %117 = vmatpush1.msra.mxu0 0.0
    %118 = vmatprep.subr.mxu0 0.0
    %119 = vmatpush1.msra.mxu0 0.0
    %120 = vmatprep.subr.mxu0 0.0
    %121 = vmatpush1.msra.mxu0 0.0
    %122 = vmatprep.subr.mxu0 0.0
    %123 = vmatpush1.msra.mxu0 0.0
    %124 = vmatprep.subr.mxu0 0.0
    %125 = vmatpush1.msra.mxu0 0.0
    %126 = vmatprep.subr.mxu0 0.0
    %127 = vmatpush1.msra.mxu0 0.0
    %128 = vmatprep.subr.mxu0 0.0
    %129 = vmatpush1.msra.mxu0 0.0
    %130 = vmatprep.subr.mxu0 0.0
    %131 = vmatpush1.msra.mxu0 0.0
    %132 = vmatprep.subr.mxu0 0.0
    %133 = vmatpush1.msra.mxu0 0.0
    %134 = vmatprep.subr.mxu0 0.0
    %135 = vmatpush1.msra.mxu0 0.0
    %136 = vmatprep.subr.mxu0 0.0
    %137 = vmatpush1.msra.mxu0 0.0
    %138 = vmatprep.subr.mxu0 0.0
    %139 = vmatpush1.msra.mxu0 0.0
    %140 = vmatprep.subr.mxu0 0.0
    %141 = vmatpush1.msra.mxu0 0.0
    %142 = vmatprep.subr.mxu0 0.0
    %143 = vmatpush1.msra.mxu0 0.0
    %144 = vmatprep.subr.mxu0 0.0
    %145 = vmatpush1.msra.mxu0 %v112
    %146 = vmatprep.subr.mxu0 0.0
    %147 = vmatpush2.msra.mxu0 0.0
    %148 = vmatprep.subr.mxu0 0.0
    %149 = vmatpush2.msra.mxu0 0.0
    %150 = vmatprep.subr.mxu0 0.0
    %151 = vmatpush2.msra.mxu0 0.0
    %152 = vmatprep.subr.mxu0 0.0
    %153 = vmatpush2.msra.mxu0 0.0
    %154 = vmatprep.subr.mxu0 0.0
    %155 = vmatpush2.msra.mxu0 0.0
    %156 = vmatprep.subr.mxu0 0.0
    %157 = vmatpush2.msra.mxu0 0.0
    %158 = vmatprep.subr.mxu0 0.0
    %159 = vmatpush2.msra.mxu0 0.0
    %160 = vmatprep.subr.mxu0 0.0
    %161 = vmatpush2.msra.mxu0 0.0
    %162 = vmatprep.subr.mxu0 0.0
    %163 = vmatpush2.msra.mxu0 0.0
    %164 = vmatprep.subr.mxu0 0.0
    %165 = vmatpush2.msra.mxu0 0.0
    %166 = vmatprep.subr.mxu0 0.0
    %167 = vmatpush2.msra.mxu0 0.0
    %168 = vmatprep.subr.mxu0 0.0
    %169 = vmatpush2.msra.mxu0 0.0
    %170 = vmatprep.subr.mxu0 0.0
    %171 = vmatpush2.msra.mxu0 0.0
    %172 = vmatprep.subr.mxu0 0.0
    %173 = vmatpush2.msra.mxu0 0.0
    %174 = vmatprep.subr.mxu0 0.0
    %175 = vmatpush2.msra.mxu0 0.0
    %176 = vmatprep.subr.mxu0 0.0
    %177 = vmatpush2.msra.mxu0 0.0
    %178 = vmatprep.mubr.f32.mxu0 0.0
    %179 = vmatmul.mubr.f32.gmra.mxu0 %v108
    %v180 = vpop.f32.mrf.mxu0
    %v181 = vadd.f32 %v104, %v180
    %v182 = vpop.f32.mrf.mxu0
    %183 = vdwg.mxu0
    %v184 = vmax.f32 %v181, 0.0
    %v185 = vld [vmem:[#allocation7] sm:$0xff]
    %v186 = vld [vmem:[#allocation7 + $0x8] sm:$0xff]
    %v187 = vld [vmem:[#allocation7 + $0x10] sm:$0xf]
    %v188 = vld [vmem:[%s4] sm:$0x1]
    %v190 = vlaneseq
    %v191 = vshrl.u32 %v190, 7
    %v192 = vsub.s32 0, %v191
    %v193 = vrot.slane %v188, %v192
    %vm195 = vcmask 162816
    %v197 = vsel %vm195, %v184, 0
    %vm199 = vcmask 1043456
    %v201 = vsel %vm199, %v187, 0
    %203 = vmatprep.subr.mxu0 0.0
    %204 = vmatpush1.msra.mxu0 0.0
    %205 = vmatprep.subr.mxu0 0.0
    %206 = vmatpush1.msra.mxu0 0.0
    %207 = vmatprep.subr.mxu0 0.0
    %208 = vmatpush1.msra.mxu0 0.0
    %209 = vmatprep.subr.mxu0 0.0
    %210 = vmatpush1.msra.mxu0 0.0
    %211 = vmatprep.subr.mxu0 0.0
    %212 = vmatpush1.msra.mxu0 0.0
    %213 = vmatprep.subr.mxu0 0.0
    %214 = vmatpush1.msra.mxu0 0.0
    %215 = vmatprep.subr.mxu0 0.0
    %216 = vmatpush1.msra.mxu0 0.0
    %217 = vmatprep.subr.mxu0 0.0
    %218 = vmatpush1.msra.mxu0 0.0
    %219 = vmatprep.subr.mxu0 0.0
    %220 = vmatpush1.msra.mxu0 0.0
    %221 = vmatprep.subr.mxu0 0.0
    %222 = vmatpush1.msra.mxu0 0.0
    %223 = vmatprep.subr.mxu0 0.0
    %224 = vmatpush1.msra.mxu0 0.0
    %225 = vmatprep.subr.mxu0 0.0
    %226 = vmatpush1.msra.mxu0 0.0
    %227 = vmatprep.subr.mxu0 0.0
    %228 = vmatpush1.msra.mxu0 0.0
    %229 = vmatprep.subr.mxu0 0.0
    %230 = vmatpush1.msra.mxu0 %v201
    %231 = vmatprep.subr.mxu0 0.0
    %232 = vmatpush1.msra.mxu0 %v186
    %233 = vmatprep.subr.mxu0 0.0
    %234 = vmatpush1.msra.mxu0 %v185
    %235 = vmatprep.subr.mxu0 0.0
    %236 = vmatpush2.msra.mxu0 0.0
    %237 = vmatprep.subr.mxu0 0.0
    %238 = vmatpush2.msra.mxu0 0.0
    %239 = vmatprep.subr.mxu0 0.0
    %240 = vmatpush2.msra.mxu0 0.0
    %241 = vmatprep.subr.mxu0 0.0
    %242 = vmatpush2.msra.mxu0 0.0
    %243 = vmatprep.subr.mxu0 0.0
    %244 = vmatpush2.msra.mxu0 0.0
    %245 = vmatprep.subr.mxu0 0.0
    %246 = vmatpush2.msra.mxu0 0.0
    %247 = vmatprep.subr.mxu0 0.0
    %248 = vmatpush2.msra.mxu0 0.0
    %249 = vmatprep.subr.mxu0 0.0
    %250 = vmatpush2.msra.mxu0 0.0
    %251 = vmatprep.subr.mxu0 0.0
    %252 = vmatpush2.msra.mxu0 0.0
    %253 = vmatprep.subr.mxu0 0.0
    %254 = vmatpush2.msra.mxu0 0.0
    %255 = vmatprep.subr.mxu0 0.0
    %256 = vmatpush2.msra.mxu0 0.0
    %257 = vmatprep.subr.mxu0 0.0
    %258 = vmatpush2.msra.mxu0 0.0
    %259 = vmatprep.subr.mxu0 0.0
    %260 = vmatpush2.msra.mxu0 0.0
    %261 = vmatprep.subr.mxu0 0.0
    %262 = vmatpush2.msra.mxu0 0.0
    %263 = vmatprep.subr.mxu0 0.0
    %264 = vmatpush2.msra.mxu0 0.0
    %265 = vmatprep.subr.mxu0 0.0
    %266 = vmatpush2.msra.mxu0 0.0
    %267 = vmatprep.mubr.f32.mxu0 0.0
    %268 = vmatmul.mubr.f32.gmra.mxu0 %v197
    %v269 = vpop.f32.mrf.mxu0
    %v270 = vadd.f32 %v193, %v269
    %v271 = vpop.f32.mrf.mxu0
    %272 = vdwg.mxu0
    %v273 = vmax.f32 %v270, 0.0
    %v274 = vld [vmem:[#allocation8] sm:$0xff]
    %v275 = vld [vmem:[#allocation8 + $0x8] sm:$0xff]
    %v276 = vld [vmem:[#allocation8 + $0x10] sm:$0xff]
    %v277 = vld [vmem:[#allocation8 + $0x18] sm:$0xff]
    %v278 = vld [vmem:[#allocation8 + $0x20] sm:$0xff]
    %v279 = vld [vmem:[%s6] sm:$0x1]
    %v281 = vlaneseq
    %v282 = vshrl.u32 %v281, 7
    %v283 = vsub.s32 0, %v282
    %v284 = vrot.slane %v279, %v283
    %vm286 = vcmask 326656
    %v288 = vsel %vm286, %v273, 0
    %290 = vmatprep.subr.mxu0 0.0
    %291 = vmatpush1.msra.mxu0 0.0
    %292 = vmatprep.subr.mxu0 0.0
    %293 = vmatpush1.msra.mxu0 0.0
    %294 = vmatprep.subr.mxu0 0.0
    %295 = vmatpush1.msra.mxu0 0.0
    %296 = vmatprep.subr.mxu0 0.0
    %297 = vmatpush1.msra.mxu0 0.0
    %298 = vmatprep.subr.mxu0 0.0
    %299 = vmatpush1.msra.mxu0 0.0
    %300 = vmatprep.subr.mxu0 0.0
    %301 = vmatpush1.msra.mxu0 0.0
    %302 = vmatprep.subr.mxu0 0.0
    %303 = vmatpush1.msra.mxu0 0.0
    %304 = vmatprep.subr.mxu0 0.0
    %305 = vmatpush1.msra.mxu0 0.0
    %306 = vmatprep.subr.mxu0 0.0
    %307 = vmatpush1.msra.mxu0 0.0
    %308 = vmatprep.subr.mxu0 0.0
    %309 = vmatpush1.msra.mxu0 0.0
    %310 = vmatprep.subr.mxu0 0.0
    %311 = vmatpush1.msra.mxu0 0.0
    %312 = vmatprep.subr.mxu0 0.0
    %313 = vmatpush1.msra.mxu0 %v278
    %314 = vmatprep.subr.mxu0 0.0
    %315 = vmatpush1.msra.mxu0 %v277
    %316 = vmatprep.subr.mxu0 0.0
    %317 = vmatpush1.msra.mxu0 %v276
    %318 = vmatprep.subr.mxu0 0.0
    %319 = vmatpush1.msra.mxu0 %v275
    %320 = vmatprep.subr.mxu0 0.0
    %321 = vmatpush1.msra.mxu0 %v274
    %322 = vmatprep.subr.mxu0 0.0
    %323 = vmatpush2.msra.mxu0 0.0
    %324 = vmatprep.subr.mxu0 0.0
    %325 = vmatpush2.msra.mxu0 0.0
    %326 = vmatprep.subr.mxu0 0.0
    %327 = vmatpush2.msra.mxu0 0.0
    %328 = vmatprep.subr.mxu0 0.0
    %329 = vmatpush2.msra.mxu0 0.0
    %330 = vmatprep.subr.mxu0 0.0
    %331 = vmatpush2.msra.mxu0 0.0
    %332 = vmatprep.subr.mxu0 0.0
    %333 = vmatpush2.msra.mxu0 0.0
    %334 = vmatprep.subr.mxu0 0.0
    %335 = vmatpush2.msra.mxu0 0.0
    %336 = vmatprep.subr.mxu0 0.0
    %337 = vmatpush2.msra.mxu0 0.0
    %338 = vmatprep.subr.mxu0 0.0
    %339 = vmatpush2.msra.mxu0 0.0
    %340 = vmatprep.subr.mxu0 0.0
    %341 = vmatpush2.msra.mxu0 0.0
    %342 = vmatprep.subr.mxu0 0.0
    %343 = vmatpush2.msra.mxu0 0.0
    %344 = vmatprep.subr.mxu0 0.0
    %345 = vmatpush2.msra.mxu0 0.0
    %346 = vmatprep.subr.mxu0 0.0
    %347 = vmatpush2.msra.mxu0 0.0
    %348 = vmatprep.subr.mxu0 0.0
    %349 = vmatpush2.msra.mxu0 0.0
    %350 = vmatprep.subr.mxu0 0.0
    %351 = vmatpush2.msra.mxu0 0.0
    %352 = vmatprep.subr.mxu0 0.0
    %353 = vmatpush2.msra.mxu0 0.0
    %354 = vmatprep.mubr.f32.mxu0 0.0
    %355 = vmatmul.mubr.f32.gmra.mxu0 %v288
    %v356 = vpop.f32.mrf.mxu0
    %v357 = vadd.f32 %v284, %v356
    %v358 = vpop.f32.mrf.mxu0
    %359 = vdwg.mxu0
    %v360 = vmax.f32 %v357, 0.0
    %v361 = vld [vmem:[#allocation10] sm:$0xff]
    %v362 = vld [vmem:[#allocation10 + $0x8] sm:$0xff]
    %v363 = vld [vmem:[#allocation10 + $0x10] sm:$0xff]
    %v364 = vld [vmem:[#allocation10 + $0x18] sm:$0xff]
    %v365 = vld [vmem:[#allocation10 + $0x20] sm:$0xff]
    %v366 = vld [vmem:[#allocation10 + $0x28] sm:$0xff]
    %v367 = vld [vmem:[#allocation10 + $0x30] sm:$0xff]
    %v368 = vld [vmem:[#allocation10 + $0x38] sm:$0xff]
    %v369 = vld [vmem:[#allocation10 + $0x40] sm:$0xff]
    %v370 = vld [vmem:[#allocation10 + $0x48] sm:$0xff]
    %v371 = vld [vmem:[#allocation10 + $0x50] sm:$0xff]
    %v372 = vld [vmem:[#allocation10 + $0x58] sm:$0xff]
    %v373 = vld [vmem:[#allocation10 + $0x60] sm:$0xff]
    %v374 = vld [vmem:[#allocation10 + $0x68] sm:$0xff]
    %v375 = vld [vmem:[#allocation10 + $0x70] sm:$0xff]
    %v376 = vld [vmem:[#allocation10 + $0x78] sm:$0xff]
    %v377 = vld [vmem:[%s8] sm:$0x1]
    %v379 = vlaneseq
    %v380 = vshrl.u32 %v379, 7
    %v381 = vsub.s32 0, %v380
    %v382 = vrot.slane %v377, %v381
    %384 = vmatprep.subr.mxu0 0.0
    %385 = vmatpush1.msra.mxu0 %v376
    %386 = vmatprep.subr.mxu0 0.0
    %387 = vmatpush1.msra.mxu0 %v375
    %388 = vmatprep.subr.mxu0 0.0
    %389 = vmatpush1.msra.mxu0 %v374
    %390 = vmatprep.subr.mxu0 0.0
    %391 = vmatpush1.msra.mxu0 %v373
    %392 = vmatprep.subr.mxu0 0.0
    %393 = vmatpush1.msra.mxu0 %v372
    %394 = vmatprep.subr.mxu0 0.0
    %395 = vmatpush1.msra.mxu0 %v371
    %396 = vmatprep.subr.mxu0 0.0
    %397 = vmatpush1.msra.mxu0 %v370
    %398 = vmatprep.subr.mxu0 0.0
    %399 = vmatpush1.msra.mxu0 %v369
    %400 = vmatprep.subr.mxu0 0.0
    %401 = vmatpush1.msra.mxu0 %v368
    %402 = vmatprep.subr.mxu0 0.0
    %403 = vmatpush1.msra.mxu0 %v367
    %404 = vmatprep.subr.mxu0 0.0
    %405 = vmatpush1.msra.mxu0 %v366
    %406 = vmatprep.subr.mxu0 0.0
    %407 = vmatpush1.msra.mxu0 %v365
    %408 = vmatprep.subr.mxu0 0.0
    %409 = vmatpush1.msra.mxu0 %v364
    %410 = vmatprep.subr.mxu0 0.0
    %411 = vmatpush1.msra.mxu0 %v363
    %412 = vmatprep.subr.mxu0 0.0
    %413 = vmatpush1.msra.mxu0 %v362
    %414 = vmatprep.subr.mxu0 0.0
    %415 = vmatpush1.msra.mxu0 %v361
    %416 = vmatprep.subr.mxu0 0.0
    %417 = vmatpush2.msra.mxu0 0.0
    %418 = vmatprep.subr.mxu0 0.0
    %419 = vmatpush2.msra.mxu0 0.0
    %420 = vmatprep.subr.mxu0 0.0
    %421 = vmatpush2.msra.mxu0 0.0
    %422 = vmatprep.subr.mxu0 0.0
    %423 = vmatpush2.msra.mxu0 0.0
    %424 = vmatprep.subr.mxu0 0.0
    %425 = vmatpush2.msra.mxu0 0.0
    %426 = vmatprep.subr.mxu0 0.0
    %427 = vmatpush2.msra.mxu0 0.0
    %428 = vmatprep.subr.mxu0 0.0
    %429 = vmatpush2.msra.mxu0 0.0
    %430 = vmatprep.subr.mxu0 0.0
    %431 = vmatpush2.msra.mxu0 0.0
    %432 = vmatprep.subr.mxu0 0.0
    %433 = vmatpush2.msra.mxu0 0.0
    %434 = vmatprep.subr.mxu0 0.0
    %435 = vmatpush2.msra.mxu0 0.0
    %436 = vmatprep.subr.mxu0 0.0
    %437 = vmatpush2.msra.mxu0 0.0
    %438 = vmatprep.subr.mxu0 0.0
    %439 = vmatpush2.msra.mxu0 0.0
    %440 = vmatprep.subr.mxu0 0.0
    %441 = vmatpush2.msra.mxu0 0.0
    %442 = vmatprep.subr.mxu0 0.0
    %443 = vmatpush2.msra.mxu0 0.0
    %444 = vmatprep.subr.mxu0 0.0
    %445 = vmatpush2.msra.mxu0 0.0
    %446 = vmatprep.subr.mxu0 0.0
    %447 = vmatpush2.msra.mxu0 0.0
    %448 = vmatprep.mubr.f32.mxu0 0.0
    %449 = vmatmul.mubr.f32.gmra.mxu0 %v360
    %v450 = vpop.f32.mrf.mxu0
    %v451 = vadd.f32 %v382, %v450
    %v452 = vpop.f32.mrf.mxu0
    %453 = vdwg.mxu0
    %454 = vst [vmem:[#allocation11] sm:$0xff] %v451
    // Predicated region
    $region58: #{tpu_custom_call.1} parent=1 // pred_check
      _
    $region59: #{tpu_custom_call.1} parent=1 // pred_check_branch
      %456 = sbr.rel (0) target = $region61
    $region60: #{tpu_custom_call.1} parent=1 // pred_region
      %s458 = ssub.s32 128, 128
      %459 = vsyncadd [#allocation4], %s458
      %s461 = sshll.u32 [#allocation11], 4
      %s462 = int_to_ptr.vmem [resolvable:$true] %s461
      %464 = dma.vmem_to_hbm [thread:$0]  %s462, 128, %s9, [#allocation4]
    $region61: #{tpu_custom_call.1} parent=1 // pred_fallthru
      _
    // Predicated region
    $region62: #{tpu_custom_call.1} parent=1 // pred_check
      _
    $region63: #{tpu_custom_call.1} parent=1 // pred_check_branch
      %466 = sbr.rel (0) target = $region65
    $region64: #{tpu_custom_call.1} parent=1 // pred_region
      %467 = dma.done [#allocation4], 128
    $region65: #{tpu_custom_call.1} parent=1 // pred_fallthru
      _
    %468 = vsyncpa [#allocation3], 1
    %469 = vsyncpa [#allocation6], 1
    %470 = vsyncpa [#allocation9], 1
    %471 = vsyncpa [#allocation4], 1

</llo_original>
